<compile_context>
chip_gen: v6e
topology: v6e:2x2x1
jax: 0.10.0
libtpu: 0.0.40
codegen_flags: <defaults>
</compile_context>

<pallas_src>
import jax
import jax.numpy as jnp
from jax.experimental import pallas as pl
from jax.experimental.pallas import tpu as pltpu

HIDDEN = 128    # hidden width of both hidden layers
OUT_PAD = 128   # final layer's output dim zero-padded to 128 lanes (lane-dense stores)


def qnet_kernel(x_ref, w1_ref, b1_ref, w2_ref, b2_ref, w3_ref, b3_ref, out_ref):
    # Straight vreg-resident chain; bias folded into each dot's epilogue.
    # Matmul operands take the weights' dtype (f32 or bf16); accumulation,
    # bias-add and ReLU stay in f32.
    h1 = jnp.maximum(
        jnp.dot(x_ref[...].astype(w1_ref.dtype), w1_ref[...],
                preferred_element_type=jnp.float32) + b1_ref[...],
        0.0)
    mm_dt = w2_ref.dtype
    h2 = jnp.maximum(
        jnp.dot(h1.astype(mm_dt), w2_ref[...],
                preferred_element_type=jnp.float32) + b2_ref[...],
        0.0)
    # Lane-dense (tb, 128) store; zero-padded action columns are sliced off by
    # the wrapper.
    out_ref[...] = (
        jnp.dot(h2.astype(mm_dt), w3_ref[...],
                preferred_element_type=jnp.float32) + b3_ref[...])


def _round_up(n, m):
    return ((n + m - 1) // m) * m


def _device_tiling_defaults():
    """Returns (tb_max, min_grid_steps) tuned per TPU generation."""
    try:
        kind = jax.devices()[0].device_kind.lower()
    except Exception:  # pragma: no cover - defensive; fall back to conservative
        kind = ""
    if "v7" in kind:
        # v7x: 64 MiB VMEM per TC, 2 TCs/chip -> smaller tiles and make the
        # "parallel" batch axis have >=2 steps so both cores get work.
        return 2048, 2
    # v5e / v6e: 128 MiB VMEM, single TensorCore -> big tiles to amortize the
    # ~0.35us per-grid-step overhead and enlarge DMA bursts.
    return 8192, 1


def _choose_batch_tile(batch, tb_max, min_steps):
    """Balanced batch tile: multiple of 8, tiles divide B with minimal overshoot."""
    if batch <= 8:
        # Block == full array dim: legal for any size, no ragged rows at all.
        return batch
    steps = max(min_steps, pl.cdiv(batch, tb_max))
    tb = _round_up(pl.cdiv(batch, steps), 8)
    return min(tb, _round_up(tb_max, 8))


def q_network_forward(x, params, *, tb_max=None, min_steps=None):
    """Forward pass of the DQN Q-network as one Pallas TPU kernel.

    x: (B, n_observations). params: dict from init_params/prepare_params with
    weights laid out (in, out), biases (1, out) f32, and w3/b3 zero-padded to
    OUT_PAD output lanes. tb_max/min_steps override the per-device defaults.
    """
    w1, b1 = params["w1"], params["b1"]
    w2, b2 = params["w2"], params["b2"]
    w3, b3 = params["w3"], params["b3"]
    n_actions = params["n_actions"]

    B, n_obs = x.shape
    assert w1.shape == (n_obs, HIDDEN)
    assert w2.shape == (HIDDEN, HIDDEN)
    assert w3.shape == (HIDDEN, OUT_PAD)
    assert b1.shape == (1, HIDDEN) and b2.shape == (1, HIDDEN) and b3.shape == (1, OUT_PAD)

    dev_tb_max, dev_min_steps = _device_tiling_defaults()
    tb_max = dev_tb_max if tb_max is None else tb_max
    min_steps = dev_min_steps if min_steps is None else min_steps
    tb = _choose_batch_tile(B, tb_max, min_steps)
    grid = (pl.cdiv(B, tb),)

    xf = x.astype(jnp.float32)

    out_padded = pl.pallas_call(
        qnet_kernel,
        out_shape=jax.ShapeDtypeStruct((B, OUT_PAD), jnp.float32),
        grid_spec=pltpu.PrefetchScalarGridSpec(
            num_scalar_prefetch=0,
            grid=grid,
            in_specs=[
                # x batch tile; last dim == full array dim (tiny K, no padding).
                # The last block may be ragged: out-of-bounds rows contain
                # arbitrary values, but each output row depends only on its own
                # input row and OOB rows are masked at writeback.
                pl.BlockSpec((tb, n_obs), lambda i: (i, 0)),
                pl.BlockSpec((n_obs, HIDDEN), lambda i: (0, 0)),    # w1 (VMEM-resident)
                pl.BlockSpec((1, HIDDEN), lambda i: (0, 0)),        # b1
                pl.BlockSpec((HIDDEN, HIDDEN), lambda i: (0, 0)),   # w2
                pl.BlockSpec((1, HIDDEN), lambda i: (0, 0)),        # b2
                pl.BlockSpec((HIDDEN, OUT_PAD), lambda i: (0, 0)),  # w3 (pre-padded)
                pl.BlockSpec((1, OUT_PAD), lambda i: (0, 0)),       # b3 (pre-padded)
            ],
            out_specs=pl.BlockSpec((tb, OUT_PAD), lambda i: (i, 0)),  # lane-dense
        ),
        compiler_params=pltpu.CompilerParams(
            dimension_semantics=("parallel",)),
    )(xf, w1, b1, w2, b2, w3, b3)

    # Only the zero-padded action lanes need slicing; there is no batch padding.
    return out_padded[:, :n_actions]


def prepare_params(w1, b1, w2, b2, w3, b3, *, matmul_dtype=jnp.float32):
    """One-time layout prep (keeps all jnp.pad/reshape out of the per-call hot path).

    Weights are (in, out) -- transposed vs. torch.nn.Linear.weight. Biases may
    be (out,) or (1, out). matmul_dtype (f32 or bf16) applies to layer-2/3
    weights only; layer 1 (K = n_obs, not MXU-bound) and all biases stay f32.
    """
    n_obs, hidden = w1.shape
    n_actions = w3.shape[1]
    assert hidden == HIDDEN and w2.shape == (HIDDEN, HIDDEN) and w3.shape[0] == HIDDEN
    assert 0 < n_actions <= OUT_PAD

    def _bias(b, width):
        b = jnp.asarray(b, jnp.float32).reshape(1, -1)
        return jnp.pad(b, ((0, 0), (0, width - b.shape[1])))

    md = jnp.dtype(matmul_dtype)
    return {
        "w1": jnp.asarray(w1, jnp.float32),
        "b1": _bias(b1, HIDDEN),
        "w2": jnp.asarray(w2, md),
        "b2": _bias(b2, HIDDEN),
        "w3": jnp.pad(jnp.asarray(w3, md), ((0, 0), (0, OUT_PAD - n_actions))),
        "b3": _bias(b3, OUT_PAD),
        "n_actions": n_actions,
    }


def init_params(key, n_observations, n_actions, *, matmul_dtype=jnp.float32):
    """PyTorch nn.Linear-style init: U[-1/sqrt(fan_in), +1/sqrt(fan_in)]."""
    ks = jax.random.split(key, 6)

    def linear(kw, kb, fan_in, fan_out):
        bound = 1.0 / jnp.sqrt(jnp.float32(fan_in))
        w = jax.random.uniform(kw, (fan_in, fan_out), jnp.float32, -bound, bound)
        b = jax.random.uniform(kb, (fan_out,), jnp.float32, -bound, bound)
        return w, b

    w1, b1 = linear(ks[0], ks[1], n_observations, HIDDEN)
    w2, b2 = linear(ks[2], ks[3], HIDDEN, HIDDEN)
    w3, b3 = linear(ks[4], ks[5], HIDDEN, n_actions)
    return prepare_params(w1, b1, w2, b2, w3, b3, matmul_dtype=matmul_dtype)


def q_network_ref(x, p):
    """Pure-JAX reference (uses the padded weights; padded columns are zero)."""
    w1 = p["w1"].astype(jnp.float32)
    w2 = p["w2"].astype(jnp.float32)
    w3 = p["w3"].astype(jnp.float32)
    h1 = jnp.maximum(x @ w1 + p["b1"], 0.0)
    h2 = jnp.maximum(h1 @ w2 + p["b2"], 0.0)
    out = h2 @ w3 + p["b3"]
    return out[:, :p["n_actions"]]


if __name__ == "__main__":
    key = jax.random.PRNGKey(0)
    k_params, k_x1, k_x2 = jax.random.split(key, 3)

    # DQN-on-CartPole sizes: n_observations=4, n_actions=2.
    n_observations, n_actions = 4, 2
    params = init_params(k_params, n_observations, n_actions)

    # Case 1: tiny batch (single full block, no ragged rows).
    x1 = jax.random.normal(k_x1, (2, n_observations), jnp.float32)
    out1 = jax.block_until_ready(q_network_forward(x1, params))
    ref1 = q_network_ref(x1, params)
    assert out1.shape == (2, n_actions)
    assert jnp.allclose(out1, ref1, atol=1e-5, rtol=1e-5)

    # Case 2: batch not a multiple of the tile -> multi-step "parallel" grid
    # with a ragged (masked-writeback) last block; no wrapper-side padding.
    x2 = jax.random.normal(k_x2, (300, n_observations), jnp.float32)
    out2 = jax.block_until_ready(q_network_forward(x2, params, tb_max=64, min_steps=1))
    ref2 = q_network_ref(x2, params)
    assert out2.shape == (300, n_actions)
    assert jnp.allclose(out2, ref2, atol=1e-5, rtol=1e-5)

    # Case 3: optional bf16 MXU path for layers 2/3 (operands bf16, f32 accum,
    # f32 bias/ReLU). Gate this on large batches in real use; here we just
    # check it compiles/runs and stays numerically close.
    params_bf16 = dict(params)
    params_bf16["w2"] = params["w2"].astype(jnp.bfloat16)
    params_bf16["w3"] = params["w3"].astype(jnp.bfloat16)
    out3 = jax.block_until_ready(q_network_forward(x2, params_bf16, tb_max=64, min_steps=1))
    assert out3.shape == (300, n_actions)
    assert bool(jnp.all(jnp.isfinite(out3)))
    assert float(jnp.max(jnp.abs(out3 - ref2))) < 0.1

    print("KERNEL_OK")
</pallas_src>

<mosaic_0001>
module attributes {stable_mosaic.version = 11 : i64} {
  func.func @qnet_kernel(%arg0: i32, %arg1: memref<2x4xf32, #tpu.memory_space<vmem>>, %arg2: memref<4x128xf32, #tpu.memory_space<vmem>>, %arg3: memref<1x128xf32, #tpu.memory_space<vmem>>, %arg4: memref<128x128xf32, #tpu.memory_space<vmem>>, %arg5: memref<1x128xf32, #tpu.memory_space<vmem>>, %arg6: memref<128x128xf32, #tpu.memory_space<vmem>>, %arg7: memref<1x128xf32, #tpu.memory_space<vmem>>, %arg8: memref<2x128xf32, #tpu.memory_space<vmem>>) attributes {dimension_semantics = [#tpu.dimension_semantics<parallel>], iteration_bounds = array<i64: 1>, scalar_prefetch = 0 : i64, scratch_operands = 0 : i64, tpu.core_type = #tpu.core_type<tc>, window_params = [{transform_indices = @transform_0, window_bounds = array<i64: 2, 4>}, {pipeline_mode = #tpu.pipeline_mode<synchronous>, transform_indices = @transform_1, window_bounds = array<i64: 4, 128>}, {pipeline_mode = #tpu.pipeline_mode<synchronous>, transform_indices = @transform_2, window_bounds = array<i64: 1, 128>}, {pipeline_mode = #tpu.pipeline_mode<synchronous>, transform_indices = @transform_3, window_bounds = array<i64: 128, 128>}, {pipeline_mode = #tpu.pipeline_mode<synchronous>, transform_indices = @transform_4, window_bounds = array<i64: 1, 128>}, {pipeline_mode = #tpu.pipeline_mode<synchronous>, transform_indices = @transform_5, window_bounds = array<i64: 128, 128>}, {pipeline_mode = #tpu.pipeline_mode<synchronous>, transform_indices = @transform_6, window_bounds = array<i64: 1, 128>}, {transform_indices = @transform_7, window_bounds = array<i64: 2, 128>}]} {
    %c0 = arith.constant 0 : index
    %c0_0 = arith.constant 0 : index
    %0 = vector.load %arg1[%c0, %c0_0] : memref<2x4xf32, #tpu.memory_space<vmem>>, vector<2x4xf32>
    %c0_1 = arith.constant 0 : index
    %c0_2 = arith.constant 0 : index
    %1 = vector.load %arg2[%c0_1, %c0_2] : memref<4x128xf32, #tpu.memory_space<vmem>>, vector<4x128xf32>
    %cst = arith.constant dense<0.000000e+00> : vector<2x128xf32>
    %2 = tpu.matmul %0, %1, %cst {dimension_numbers = #tpu.dot_dimension_numbers<[1], [0], [0], [1], [0, 0, 1, 1], [], []>} : vector<2x4xf32>, vector<4x128xf32>, vector<2x128xf32> -> vector<2x128xf32>
    %c0_3 = arith.constant 0 : index
    %c0_4 = arith.constant 0 : index
    %3 = vector.load %arg3[%c0_3, %c0_4] : memref<1x128xf32, #tpu.memory_space<vmem>>, vector<1x128xf32>
    %4 = vector.broadcast %3 : vector<1x128xf32> to vector<2x128xf32>
    %5 = arith.addf %2, %4 : vector<2x128xf32>
    %cst_5 = arith.constant 0.000000e+00 : f32
    %6 = vector.broadcast %cst_5 : f32 to vector<2x128xf32>
    %7 = arith.maximumf %5, %6 : vector<2x128xf32>
    %c0_6 = arith.constant 0 : index
    %c0_7 = arith.constant 0 : index
    %8 = vector.load %arg4[%c0_6, %c0_7] : memref<128x128xf32, #tpu.memory_space<vmem>>, vector<128x128xf32>
    %cst_8 = arith.constant dense<0.000000e+00> : vector<2x128xf32>
    %9 = tpu.matmul %7, %8, %cst_8 {dimension_numbers = #tpu.dot_dimension_numbers<[1], [0], [0], [1], [0, 0, 1, 1], [], []>} : vector<2x128xf32>, vector<128x128xf32>, vector<2x128xf32> -> vector<2x128xf32>
    %c0_9 = arith.constant 0 : index
    %c0_10 = arith.constant 0 : index
    %10 = vector.load %arg5[%c0_9, %c0_10] : memref<1x128xf32, #tpu.memory_space<vmem>>, vector<1x128xf32>
    %11 = vector.broadcast %10 : vector<1x128xf32> to vector<2x128xf32>
    %12 = arith.addf %9, %11 : vector<2x128xf32>
    %cst_11 = arith.constant 0.000000e+00 : f32
    %13 = vector.broadcast %cst_11 : f32 to vector<2x128xf32>
    %14 = arith.maximumf %12, %13 : vector<2x128xf32>
    %c0_12 = arith.constant 0 : index
    %c0_13 = arith.constant 0 : index
    %15 = vector.load %arg6[%c0_12, %c0_13] : memref<128x128xf32, #tpu.memory_space<vmem>>, vector<128x128xf32>
    %cst_14 = arith.constant dense<0.000000e+00> : vector<2x128xf32>
    %16 = tpu.matmul %14, %15, %cst_14 {dimension_numbers = #tpu.dot_dimension_numbers<[1], [0], [0], [1], [0, 0, 1, 1], [], []>} : vector<2x128xf32>, vector<128x128xf32>, vector<2x128xf32> -> vector<2x128xf32>
    %c0_15 = arith.constant 0 : index
    %c0_16 = arith.constant 0 : index
    %17 = vector.load %arg7[%c0_15, %c0_16] : memref<1x128xf32, #tpu.memory_space<vmem>>, vector<1x128xf32>
    %18 = vector.broadcast %17 : vector<1x128xf32> to vector<2x128xf32>
    %19 = arith.addf %16, %18 : vector<2x128xf32>
    %c0_17 = arith.constant 0 : index
    %c0_18 = arith.constant 0 : index
    %20 = vector.load %arg8[%c0_17, %c0_18] : memref<2x128xf32, #tpu.memory_space<vmem>>, vector<2x128xf32>
    tpu.vector_store %arg8[%c0_17, %c0_18], %19 {strides = array<i32>} : memref<2x128xf32, #tpu.memory_space<vmem>>, vector<2x128xf32>,
    return
  }
  func.func @transform_0(%arg0: i32) -> (i32, i32) {
    %c0_i32 = arith.constant 0 : i32
    %c0_i32_0 = arith.constant 0 : i32
    return %arg0, %c0_i32 : i32, i32
  }
  func.func @transform_1(%arg0: i32) -> (i32, i32) {
    %c0_i32 = arith.constant 0 : i32
    %c0_i32_0 = arith.constant 0 : i32
    %c0_i32_1 = arith.constant 0 : i32
    return %c0_i32, %c0_i32_0 : i32, i32
  }
  func.func @transform_2(%arg0: i32) -> (i32, i32) {
    %c0_i32 = arith.constant 0 : i32
    %c0_i32_0 = arith.constant 0 : i32
    %c0_i32_1 = arith.constant 0 : i32
    return %c0_i32, %c0_i32_0 : i32, i32
  }
  func.func @transform_3(%arg0: i32) -> (i32, i32) {
    %c0_i32 = arith.constant 0 : i32
    %c0_i32_0 = arith.constant 0 : i32
    %c0_i32_1 = arith.constant 0 : i32
    return %c0_i32, %c0_i32_0 : i32, i32
  }
  func.func @transform_4(%arg0: i32) -> (i32, i32) {
    %c0_i32 = arith.constant 0 : i32
    %c0_i32_0 = arith.constant 0 : i32
    %c0_i32_1 = arith.constant 0 : i32
    return %c0_i32, %c0_i32_0 : i32, i32
  }
  func.func @transform_5(%arg0: i32) -> (i32, i32) {
    %c0_i32 = arith.constant 0 : i32
    %c0_i32_0 = arith.constant 0 : i32
    %c0_i32_1 = arith.constant 0 : i32
    return %c0_i32, %c0_i32_0 : i32, i32
  }
  func.func @transform_6(%arg0: i32) -> (i32, i32) {
    %c0_i32 = arith.constant 0 : i32
    %c0_i32_0 = arith.constant 0 : i32
    %c0_i32_1 = arith.constant 0 : i32
    return %c0_i32, %c0_i32_0 : i32, i32
  }
  func.func @transform_7(%arg0: i32) -> (i32, i32) {
    %c0_i32 = arith.constant 0 : i32
    %c0_i32_0 = arith.constant 0 : i32
    return %arg0, %c0_i32 : i32, i32
  }
}

</mosaic_0001>

<llo_original>
// kernel: tpu_custom_call.1
$region0: #{tpu_custom_call.1}
  #allocation0 [shape = 'u32[]', space=smem, size = 0x4, offset = 0x4, fixed_abs, tag = 'smem constant byte address 0x4 - core index']
  #allocation1 [shape = 'u32[144,128]{1,0:T(1,128)}', space=vmem, size = 0x12000, scoped, tag = 'internal scratch']
  %s0 = inlined_call_operand.hbm [shape: f32[2,4], index: 0, kind: input, shape index: {}]
  %s1 = inlined_call_operand.hbm [shape: f32[4,128], index: 1, kind: input, shape index: {}]
  %s2 = inlined_call_operand.vmem [shape: f32[1,128], index: 2, kind: input, shape index: {}]
  %s3 = inlined_call_operand.hbm [shape: f32[128,128], index: 3, kind: input, shape index: {}]
  %s4 = inlined_call_operand.vmem [shape: f32[1,128], index: 4, kind: input, shape index: {}]
  %s5 = inlined_call_operand.hbm [shape: f32[128,128], index: 5, kind: input, shape index: {}]
  %s6 = inlined_call_operand.vmem [shape: f32[1,128], index: 6, kind: input, shape index: {}]
  %s7 = inlined_call_operand.hbm [shape: f32[2,128], index: 7, kind: output, shape index: {}]
  %s8 = sld [smem:[#allocation0]]
  $region54: #{tpu_custom_call.1} parent=0
    _
  %s10 = ssub.s32 1, %s8
  %s11 = scalar_select 0, %s10, %s8
  $region1: #{tpu_custom_call.1} parent=0
    #allocation2 [shape = 'u8[1024]{0}', space=vmem, size = 0x400, scoped, tag = 'input window, operand 0, single buffered']
    #allocation3 [shape = 's32[1]{0}', space=sflag, size = 0x4, scoped, tag = 'scoped memory for tpu_custom_call.1']
    #allocation4 [shape = 's32[1]{0}', space=sflag, size = 0x4, scoped, tag = 'scoped memory for tpu_custom_call.1']
    #allocation5 [shape = 'u8[2048]{0}', space=vmem, size = 0x800, scoped, tag = 'input window, operand 1, single buffered']
    #allocation6 [shape = 's32[1]{0}', space=sflag, size = 0x4, scoped, tag = 'scoped memory for tpu_custom_call.1']
    #allocation7 [shape = 'u8[65536]{0}', space=vmem, size = 0x10000, scoped, tag = 'input window, operand 3, single buffered']
    #allocation8 [shape = 'u8[65536]{0}', space=vmem, size = 0x10000, scoped, tag = 'input window, operand 5, single buffered']
    #allocation9 [shape = 's32[1]{0}', space=sflag, size = 0x4, scoped, tag = 'scoped memory for tpu_custom_call.1']
    #allocation10 [shape = 'u8[1024]{0}', space=vmem, size = 0x400, scoped, tag = 'output window, operand 0, single buffered']
    %12 = vsyncpa [#allocation3], 0
    %13 = vsyncpa [#allocation6], 0
    %14 = vsyncpa [#allocation9], 0
    %15 = vsyncpa [#allocation4], 0
    // Predicated region
    $region2: #{tpu_custom_call.1} parent=1 // pred_check
      _
    $region3: #{tpu_custom_call.1} parent=1 // pred_check_branch
      %17 = sbr.rel (0) target = $region5
    $region4: #{tpu_custom_call.1} parent=1 // pred_region
      %s19 = ssub.s32 32, 32
      %20 = vsyncadd [#allocation3], %s19
      %s22 = sshll.u32 [#allocation2], 4
      %s23 = int_to_ptr.vmem [resolvable:$true] %s22
      %25 = dma.hbm_to_vmem [thread:$0]  %s0, 32, %s23, [#allocation3]
    $region5: #{tpu_custom_call.1} parent=1 // pred_fallthru
      _
    // Predicated region
    $region6: #{tpu_custom_call.1} parent=1 // pred_check
      _
    $region7: #{tpu_custom_call.1} parent=1 // pred_check_branch
      %27 = sbr.rel (0) target = $region9
    $region8: #{tpu_custom_call.1} parent=1 // pred_region
      %s29 = ssub.s32 64, 64
      %30 = vsyncadd [#allocation6], %s29
      %s32 = sshll.u32 [#allocation5], 4
      %s33 = int_to_ptr.vmem [resolvable:$true] %s32
      %35 = dma.hbm_to_vmem [thread:$0]  %s1, 64, %s33, [#allocation6]
    $region9: #{tpu_custom_call.1} parent=1 // pred_fallthru
      _
    // Predicated region
    $region10: #{tpu_custom_call.1} parent=1 // pred_check
      _
    $region11: #{tpu_custom_call.1} parent=1 // pred_check_branch
      %37 = sbr.rel (0) target = $region13
    $region12: #{tpu_custom_call.1} parent=1 // pred_region
      _
    $region13: #{tpu_custom_call.1} parent=1 // pred_fallthru
      _
    // Predicated region
    $region14: #{tpu_custom_call.1} parent=1 // pred_check
      _
    $region15: #{tpu_custom_call.1} parent=1 // pred_check_branch
      %39 = sbr.rel (0) target = $region17
    $region16: #{tpu_custom_call.1} parent=1 // pred_region
      %s41 = ssub.s32 2048, 2048
      %42 = vsyncadd [#allocation6], %s41
      %s43 = sshll.u32 [#allocation7], 4
      %s44 = int_to_ptr.vmem [resolvable:$true] %s43
      %49 = dma.hbm_to_vmem [thread:$0]  %s3, 2048, %s44, [#allocation6], 128, 128, 8
    $region17: #{tpu_custom_call.1} parent=1 // pred_fallthru
      _
    // Predicated region
    $region18: #{tpu_custom_call.1} parent=1 // pred_check
      _
    $region19: #{tpu_custom_call.1} parent=1 // pred_check_branch
      %51 = sbr.rel (0) target = $region21
    $region20: #{tpu_custom_call.1} parent=1 // pred_region
      _
    $region21: #{tpu_custom_call.1} parent=1 // pred_fallthru
      _
    // Predicated region
    $region22: #{tpu_custom_call.1} parent=1 // pred_check
      _
    $region23: #{tpu_custom_call.1} parent=1 // pred_check_branch
      %53 = sbr.rel (0) target = $region25
    $region24: #{tpu_custom_call.1} parent=1 // pred_region
      %s55 = ssub.s32 2048, 2048
      %56 = vsyncadd [#allocation9], %s55
      %s57 = sshll.u32 [#allocation8], 4
      %s58 = int_to_ptr.vmem [resolvable:$true] %s57
      %63 = dma.hbm_to_vmem [thread:$0]  %s5, 2048, %s58, [#allocation9], 128, 128, 8
    $region25: #{tpu_custom_call.1} parent=1 // pred_fallthru
      _
    // Predicated region
    $region26: #{tpu_custom_call.1} parent=1 // pred_check
      _
    $region27: #{tpu_custom_call.1} parent=1 // pred_check_branch
      %65 = sbr.rel (0) target = $region29
    $region28: #{tpu_custom_call.1} parent=1 // pred_region
      _
    $region29: #{tpu_custom_call.1} parent=1 // pred_fallthru
      _
    // Predicated region
    $region30: #{tpu_custom_call.1} parent=1 // pred_check
      _
    $region31: #{tpu_custom_call.1} parent=1 // pred_check_branch
      %67 = sbr.rel (0) target = $region33
    $region32: #{tpu_custom_call.1} parent=1 // pred_region
      %68 = dma.done [#allocation3], 32
    $region33: #{tpu_custom_call.1} parent=1 // pred_fallthru
      _
    // Predicated region
    $region34: #{tpu_custom_call.1} parent=1 // pred_check
      _
    $region35: #{tpu_custom_call.1} parent=1 // pred_check_branch
      %70 = sbr.rel (0) target = $region37
    $region36: #{tpu_custom_call.1} parent=1 // pred_region
      %71 = dma.done [#allocation6], 64
    $region37: #{tpu_custom_call.1} parent=1 // pred_fallthru
      _
    // Predicated region
    $region38: #{tpu_custom_call.1} parent=1 // pred_check
      _
    $region39: #{tpu_custom_call.1} parent=1 // pred_check_branch
      %73 = sbr.rel (0) target = $region41
    $region40: #{tpu_custom_call.1} parent=1 // pred_region
      %74 = dma.done [#allocation6], 2048
    $region41: #{tpu_custom_call.1} parent=1 // pred_fallthru
      _
    // Predicated region
    $region42: #{tpu_custom_call.1} parent=1 // pred_check
      _
    $region43: #{tpu_custom_call.1} parent=1 // pred_check_branch
      %76 = sbr.rel (0) target = $region45
    $region44: #{tpu_custom_call.1} parent=1 // pred_region
      %77 = dma.done [#allocation9], 2048
    $region45: #{tpu_custom_call.1} parent=1 // pred_fallthru
      _
    %v78 = vld [vmem:[#allocation2] sm:$0x3]
    %v79 = vld [vmem:[#allocation5] sm:$0xf]
    %v80 = vld [vmem:[%s2] sm:$0x1]
    %v82 = vlaneseq
    %v83 = vshrl.u32 %v82, 7
    %v84 = vsub.s32 0, %v83
    %v85 = vrot.slane %v80, %v84
    %vm87 = vcmask 31744
    %v89 = vsel %vm87, %v78, 0
    %vm91 = vcmask 1043456
    %v93 = vsel %vm91, %v79, 0
    %95 = vmatprep.subr.mxu0 0.0
    %96 = vmatpush1.msra.mxu0 0.0
    %97 = vmatprep.subr.mxu0 0.0
    %98 = vmatpush1.msra.mxu0 0.0
    %99 = vmatprep.subr.mxu0 0.0
    %100 = vmatpush1.msra.mxu0 0.0
    %101 = vmatprep.subr.mxu0 0.0
    %102 = vmatpush1.msra.mxu0 0.0
    %103 = vmatprep.subr.mxu0 0.0
    %104 = vmatpush1.msra.mxu0 0.0
    %105 = vmatprep.subr.mxu0 0.0
    %106 = vmatpush1.msra.mxu0 0.0
    %107 = vmatprep.subr.mxu0 0.0
    %108 = vmatpush1.msra.mxu0 0.0
    %109 = vmatprep.subr.mxu0 0.0
    %110 = vmatpush1.msra.mxu0 0.0
    %111 = vmatprep.subr.mxu0 0.0
    %112 = vmatpush1.msra.mxu0 0.0
    %113 = vmatprep.subr.mxu0 0.0
    %114 = vmatpush1.msra.mxu0 0.0
    %115 = vmatprep.subr.mxu0 0.0
    %116 = vmatpush1.msra.mxu0 0.0
    %117 = vmatprep.subr.mxu0 0.0
    %118 = vmatpush1.msra.mxu0 0.0
    %119 = vmatprep.subr.mxu0 0.0
    %120 = vmatpush1.msra.mxu0 0.0
    %121 = vmatprep.subr.mxu0 0.0
    %122 = vmatpush1.msra.mxu0 0.0
    %123 = vmatprep.subr.mxu0 0.0
    %124 = vmatpush1.msra.mxu0 0.0
    %125 = vmatprep.subr.mxu0 0.0
    %126 = vmatpush1.msra.mxu0 %v93
    %127 = vmatprep.subr.mxu0 0.0
    %128 = vmatpush2.msra.mxu0 0.0
    %129 = vmatprep.subr.mxu0 0.0
    %130 = vmatpush2.msra.mxu0 0.0
    %131 = vmatprep.subr.mxu0 0.0
    %132 = vmatpush2.msra.mxu0 0.0
    %133 = vmatprep.subr.mxu0 0.0
    %134 = vmatpush2.msra.mxu0 0.0
    %135 = vmatprep.subr.mxu0 0.0
    %136 = vmatpush2.msra.mxu0 0.0
    %137 = vmatprep.subr.mxu0 0.0
    %138 = vmatpush2.msra.mxu0 0.0
    %139 = vmatprep.subr.mxu0 0.0
    %140 = vmatpush2.msra.mxu0 0.0
    %141 = vmatprep.subr.mxu0 0.0
    %142 = vmatpush2.msra.mxu0 0.0
    %143 = vmatprep.subr.mxu0 0.0
    %144 = vmatpush2.msra.mxu0 0.0
    %145 = vmatprep.subr.mxu0 0.0
    %146 = vmatpush2.msra.mxu0 0.0
    %147 = vmatprep.subr.mxu0 0.0
    %148 = vmatpush2.msra.mxu0 0.0
    %149 = vmatprep.subr.mxu0 0.0
    %150 = vmatpush2.msra.mxu0 0.0
    %151 = vmatprep.subr.mxu0 0.0
    %152 = vmatpush2.msra.mxu0 0.0
    %153 = vmatprep.subr.mxu0 0.0
    %154 = vmatpush2.msra.mxu0 0.0
    %155 = vmatprep.subr.mxu0 0.0
    %156 = vmatpush2.msra.mxu0 0.0
    %157 = vmatprep.subr.mxu0 0.0
    %158 = vmatpush2.msra.mxu0 0.0
    %159 = vmatprep.mubr.f32.mxu0 0.0
    %160 = vmatmul.mubr.f32.gmra.mxu0 %v89
    %v161 = vpop.f32.mrf.mxu0
    %v162 = vadd.f32 %v85, %v161
    %v163 = vpop.f32.mrf.mxu0
    %164 = vdwg.mxu0
    %v165 = vmax.f32 %v162, 0.0
    %v166 = vld [vmem:[#allocation7] sm:$0xff]
    %v167 = vld [vmem:[#allocation7 + $0x8] sm:$0xff]
    %v168 = vld [vmem:[#allocation7 + $0x10] sm:$0xff]
    %v169 = vld [vmem:[#allocation7 + $0x18] sm:$0xff]
    %v170 = vld [vmem:[#allocation7 + $0x20] sm:$0xff]
    %v171 = vld [vmem:[#allocation7 + $0x28] sm:$0xff]
    %v172 = vld [vmem:[#allocation7 + $0x30] sm:$0xff]
    %v173 = vld [vmem:[#allocation7 + $0x38] sm:$0xff]
    %v174 = vld [vmem:[#allocation7 + $0x40] sm:$0xff]
    %v175 = vld [vmem:[#allocation7 + $0x48] sm:$0xff]
    %v176 = vld [vmem:[#allocation7 + $0x50] sm:$0xff]
    %v177 = vld [vmem:[#allocation7 + $0x58] sm:$0xff]
    %v178 = vld [vmem:[#allocation7 + $0x60] sm:$0xff]
    %v179 = vld [vmem:[#allocation7 + $0x68] sm:$0xff]
    %v180 = vld [vmem:[#allocation7 + $0x70] sm:$0xff]
    %v181 = vld [vmem:[#allocation7 + $0x78] sm:$0xff]
    %v182 = vld [vmem:[%s4] sm:$0x1]
    %v184 = vlaneseq
    %v185 = vshrl.u32 %v184, 7
    %v186 = vsub.s32 0, %v185
    %v187 = vrot.slane %v182, %v186
    %189 = vmatprep.subr.mxu0 0.0
    %190 = vmatpush1.msra.mxu0 %v181
    %191 = vmatprep.subr.mxu0 0.0
    %192 = vmatpush1.msra.mxu0 %v180
    %193 = vmatprep.subr.mxu0 0.0
    %194 = vmatpush1.msra.mxu0 %v179
    %195 = vmatprep.subr.mxu0 0.0
    %196 = vmatpush1.msra.mxu0 %v178
    %197 = vmatprep.subr.mxu0 0.0
    %198 = vmatpush1.msra.mxu0 %v177
    %199 = vmatprep.subr.mxu0 0.0
    %200 = vmatpush1.msra.mxu0 %v176
    %201 = vmatprep.subr.mxu0 0.0
    %202 = vmatpush1.msra.mxu0 %v175
    %203 = vmatprep.subr.mxu0 0.0
    %204 = vmatpush1.msra.mxu0 %v174
    %205 = vmatprep.subr.mxu0 0.0
    %206 = vmatpush1.msra.mxu0 %v173
    %207 = vmatprep.subr.mxu0 0.0
    %208 = vmatpush1.msra.mxu0 %v172
    %209 = vmatprep.subr.mxu0 0.0
    %210 = vmatpush1.msra.mxu0 %v171
    %211 = vmatprep.subr.mxu0 0.0
    %212 = vmatpush1.msra.mxu0 %v170
    %213 = vmatprep.subr.mxu0 0.0
    %214 = vmatpush1.msra.mxu0 %v169
    %215 = vmatprep.subr.mxu0 0.0
    %216 = vmatpush1.msra.mxu0 %v168
    %217 = vmatprep.subr.mxu0 0.0
    %218 = vmatpush1.msra.mxu0 %v167
    %219 = vmatprep.subr.mxu0 0.0
    %220 = vmatpush1.msra.mxu0 %v166
    %221 = vmatprep.subr.mxu0 0.0
    %222 = vmatpush2.msra.mxu0 0.0
    %223 = vmatprep.subr.mxu0 0.0
    %224 = vmatpush2.msra.mxu0 0.0
    %225 = vmatprep.subr.mxu0 0.0
    %226 = vmatpush2.msra.mxu0 0.0
    %227 = vmatprep.subr.mxu0 0.0
    %228 = vmatpush2.msra.mxu0 0.0
    %229 = vmatprep.subr.mxu0 0.0
    %230 = vmatpush2.msra.mxu0 0.0
    %231 = vmatprep.subr.mxu0 0.0
    %232 = vmatpush2.msra.mxu0 0.0
    %233 = vmatprep.subr.mxu0 0.0
    %234 = vmatpush2.msra.mxu0 0.0
    %235 = vmatprep.subr.mxu0 0.0
    %236 = vmatpush2.msra.mxu0 0.0
    %237 = vmatprep.subr.mxu0 0.0
    %238 = vmatpush2.msra.mxu0 0.0
    %239 = vmatprep.subr.mxu0 0.0
    %240 = vmatpush2.msra.mxu0 0.0
    %241 = vmatprep.subr.mxu0 0.0
    %242 = vmatpush2.msra.mxu0 0.0
    %243 = vmatprep.subr.mxu0 0.0
    %244 = vmatpush2.msra.mxu0 0.0
    %245 = vmatprep.subr.mxu0 0.0
    %246 = vmatpush2.msra.mxu0 0.0
    %247 = vmatprep.subr.mxu0 0.0
    %248 = vmatpush2.msra.mxu0 0.0
    %249 = vmatprep.subr.mxu0 0.0
    %250 = vmatpush2.msra.mxu0 0.0
    %251 = vmatprep.subr.mxu0 0.0
    %252 = vmatpush2.msra.mxu0 0.0
    %253 = vmatprep.mubr.f32.mxu0 0.0
    %254 = vmatmul.mubr.f32.gmra.mxu0 %v165
    %v255 = vpop.f32.mrf.mxu0
    %v256 = vadd.f32 %v187, %v255
    %v257 = vpop.f32.mrf.mxu0
    %258 = vdwg.mxu0
    %v259 = vmax.f32 %v256, 0.0
    %v260 = vld [vmem:[#allocation8] sm:$0xff]
    %v261 = vld [vmem:[#allocation8 + $0x8] sm:$0xff]
    %v262 = vld [vmem:[#allocation8 + $0x10] sm:$0xff]
    %v263 = vld [vmem:[#allocation8 + $0x18] sm:$0xff]
    %v264 = vld [vmem:[#allocation8 + $0x20] sm:$0xff]
    %v265 = vld [vmem:[#allocation8 + $0x28] sm:$0xff]
    %v266 = vld [vmem:[#allocation8 + $0x30] sm:$0xff]
    %v267 = vld [vmem:[#allocation8 + $0x38] sm:$0xff]
    %v268 = vld [vmem:[#allocation8 + $0x40] sm:$0xff]
    %v269 = vld [vmem:[#allocation8 + $0x48] sm:$0xff]
    %v270 = vld [vmem:[#allocation8 + $0x50] sm:$0xff]
    %v271 = vld [vmem:[#allocation8 + $0x58] sm:$0xff]
    %v272 = vld [vmem:[#allocation8 + $0x60] sm:$0xff]
    %v273 = vld [vmem:[#allocation8 + $0x68] sm:$0xff]
    %v274 = vld [vmem:[#allocation8 + $0x70] sm:$0xff]
    %v275 = vld [vmem:[#allocation8 + $0x78] sm:$0xff]
    %v276 = vld [vmem:[%s6] sm:$0x1]
    %v278 = vlaneseq
    %v279 = vshrl.u32 %v278, 7
    %v280 = vsub.s32 0, %v279
    %v281 = vrot.slane %v276, %v280
    %283 = vmatprep.subr.mxu0 0.0
    %284 = vmatpush1.msra.mxu0 %v275
    %285 = vmatprep.subr.mxu0 0.0
    %286 = vmatpush1.msra.mxu0 %v274
    %287 = vmatprep.subr.mxu0 0.0
    %288 = vmatpush1.msra.mxu0 %v273
    %289 = vmatprep.subr.mxu0 0.0
    %290 = vmatpush1.msra.mxu0 %v272
    %291 = vmatprep.subr.mxu0 0.0
    %292 = vmatpush1.msra.mxu0 %v271
    %293 = vmatprep.subr.mxu0 0.0
    %294 = vmatpush1.msra.mxu0 %v270
    %295 = vmatprep.subr.mxu0 0.0
    %296 = vmatpush1.msra.mxu0 %v269
    %297 = vmatprep.subr.mxu0 0.0
    %298 = vmatpush1.msra.mxu0 %v268
    %299 = vmatprep.subr.mxu0 0.0
    %300 = vmatpush1.msra.mxu0 %v267
    %301 = vmatprep.subr.mxu0 0.0
    %302 = vmatpush1.msra.mxu0 %v266
    %303 = vmatprep.subr.mxu0 0.0
    %304 = vmatpush1.msra.mxu0 %v265
    %305 = vmatprep.subr.mxu0 0.0
    %306 = vmatpush1.msra.mxu0 %v264
    %307 = vmatprep.subr.mxu0 0.0
    %308 = vmatpush1.msra.mxu0 %v263
    %309 = vmatprep.subr.mxu0 0.0
    %310 = vmatpush1.msra.mxu0 %v262
    %311 = vmatprep.subr.mxu0 0.0
    %312 = vmatpush1.msra.mxu0 %v261
    %313 = vmatprep.subr.mxu0 0.0
    %314 = vmatpush1.msra.mxu0 %v260
    %315 = vmatprep.subr.mxu0 0.0
    %316 = vmatpush2.msra.mxu0 0.0
    %317 = vmatprep.subr.mxu0 0.0
    %318 = vmatpush2.msra.mxu0 0.0
    %319 = vmatprep.subr.mxu0 0.0
    %320 = vmatpush2.msra.mxu0 0.0
    %321 = vmatprep.subr.mxu0 0.0
    %322 = vmatpush2.msra.mxu0 0.0
    %323 = vmatprep.subr.mxu0 0.0
    %324 = vmatpush2.msra.mxu0 0.0
    %325 = vmatprep.subr.mxu0 0.0
    %326 = vmatpush2.msra.mxu0 0.0
    %327 = vmatprep.subr.mxu0 0.0
    %328 = vmatpush2.msra.mxu0 0.0
    %329 = vmatprep.subr.mxu0 0.0
    %330 = vmatpush2.msra.mxu0 0.0
    %331 = vmatprep.subr.mxu0 0.0
    %332 = vmatpush2.msra.mxu0 0.0
    %333 = vmatprep.subr.mxu0 0.0
    %334 = vmatpush2.msra.mxu0 0.0
    %335 = vmatprep.subr.mxu0 0.0
    %336 = vmatpush2.msra.mxu0 0.0
    %337 = vmatprep.subr.mxu0 0.0
    %338 = vmatpush2.msra.mxu0 0.0
    %339 = vmatprep.subr.mxu0 0.0
    %340 = vmatpush2.msra.mxu0 0.0
    %341 = vmatprep.subr.mxu0 0.0
    %342 = vmatpush2.msra.mxu0 0.0
    %343 = vmatprep.subr.mxu0 0.0
    %344 = vmatpush2.msra.mxu0 0.0
    %345 = vmatprep.subr.mxu0 0.0
    %346 = vmatpush2.msra.mxu0 0.0
    %347 = vmatprep.mubr.f32.mxu0 0.0
    %348 = vmatmul.mubr.f32.gmra.mxu0 %v259
    %v349 = vpop.f32.mrf.mxu0
    %v350 = vadd.f32 %v281, %v349
    %v351 = vpop.f32.mrf.mxu0
    %352 = vdwg.mxu0
    %353 = vst [vmem:[#allocation10] sm:$0x3] %v350
    // Predicated region
    $region46: #{tpu_custom_call.1} parent=1 // pred_check
      _
    $region47: #{tpu_custom_call.1} parent=1 // pred_check_branch
      %355 = sbr.rel (0) target = $region49
    $region48: #{tpu_custom_call.1} parent=1 // pred_region
      %s357 = ssub.s32 32, 32
      %358 = vsyncadd [#allocation4], %s357
      %s360 = sshll.u32 [#allocation10], 4
      %s361 = int_to_ptr.vmem [resolvable:$true] %s360
      %363 = dma.vmem_to_hbm [thread:$0]  %s361, 32, %s7, [#allocation4]
    $region49: #{tpu_custom_call.1} parent=1 // pred_fallthru
      _
    // Predicated region
    $region50: #{tpu_custom_call.1} parent=1 // pred_check
      _
    $region51: #{tpu_custom_call.1} parent=1 // pred_check_branch
      %365 = sbr.rel (0) target = $region53
    $region52: #{tpu_custom_call.1} parent=1 // pred_region
      %366 = dma.done [#allocation4], 32
    $region53: #{tpu_custom_call.1} parent=1 // pred_fallthru
      _
    %367 = vsyncpa [#allocation3], 1
    %368 = vsyncpa [#allocation6], 1
    %369 = vsyncpa [#allocation9], 1
    %370 = vsyncpa [#allocation4], 1

</llo_original>
